<compile_context>
chip_gen: v5e
topology: v5e:2x2
jax: 0.10.0
libtpu: 0.0.40
codegen_flags: <defaults>
</compile_context>

<pallas_src>
import functools
import math

import jax
import jax.numpy as jnp
from jax.experimental import pallas as pl
from jax.experimental.pallas import tpu as pltpu

_MIN_PALLAS_ELEMENTS = 64 * 1024        # below this, fused XLA elementwise wins
_TARGET_BLOCK_BYTES = 4 * 1024 * 1024   # ~4 MiB blocks (amortizes ~0.35us/step)
_MAX_BLOCK_BYTES = 8 * 1024 * 1024      # hard cap; in+out double-buffered <= 32 MiB
_MIN_PROGRAMS = 4                       # keep DMA/compute overlap per TensorCore
_VMEM_LIMIT_BYTES = 32 * 1024 * 1024    # explicit: v5e default scoped is only 16 MiB


def _temperature_tanh_kernel(x_ref, o_ref, *, inv_temperature):
    # One VPU mul + one native EUP tanh per vreg; HBM bandwidth is the bottleneck.
    o_ref[...] = jnp.tanh(x_ref[...] * inv_temperature)


def _round_up(value, multiple):
    return ((value + multiple - 1) // multiple) * multiple


def _round_down(value, multiple):
    return (value // multiple) * multiple


def _compiler_params(num_grid_dims):
    return pltpu.CompilerParams(
        dimension_semantics=("parallel",) * num_grid_dims,
        vmem_limit_bytes=_VMEM_LIMIT_BYTES,
    )


def _cost(n, itemsize):
    return pl.CostEstimate(flops=n, transcendentals=n, bytes_accessed=2 * n * itemsize)


def _slab_call(x2d, kernel, pack, itemsize):
    """Lane-dense (rows, lanes) path; lanes is a multiple of 128."""
    rows, lanes = x2d.shape
    if pack * lanes * itemsize > _MAX_BLOCK_BYTES:
        return None  # absurdly wide rows: let XLA handle it
    tile_r = max(pack, _round_down(_TARGET_BLOCK_BYTES // (lanes * itemsize), pack))
    # Keep >= _MIN_PROGRAMS grid steps when rows allow: with only 1-2 steps per
    # TensorCore there is no DMA/compute overlap (worst on v7x megacore).
    if rows >= _MIN_PROGRAMS * pack:
        tile_r = min(tile_r, max(pack, _round_down(rows // _MIN_PROGRAMS, pack)))
    if tile_r >= rows:
        tile_r = rows  # single block spanning all rows (full-dim block is legal)
    grid = (pl.cdiv(rows, tile_r),)
    # NOTE: pipeline_mode=pl.Buffered(3) on the input is an optional knob for
    # v7x if a trace ever shows exposed DMA; default double-buffering kept here.
    return pl.pallas_call(
        kernel,
        out_shape=jax.ShapeDtypeStruct((rows, lanes), x2d.dtype),
        grid=grid,
        in_specs=[pl.BlockSpec((tile_r, lanes), lambda i: (i, 0))],
        out_specs=pl.BlockSpec((tile_r, lanes), lambda i: (i, 0)),
        compiler_params=_compiler_params(1),
        cost_estimate=_cost(rows * lanes, itemsize),
    )(x2d)


def _nd_call(x, kernel, pack, itemsize):
    """No-reshape path: grid over leading dims (+ H tiles), block = (hb, full W)."""
    shape = x.shape
    lead, H, W = shape[:-2], shape[-2], shape[-1]
    row_bytes = W * itemsize
    if pack * row_bytes > _MAX_BLOCK_BYTES:
        return None

    hb = max(pack, _round_down(_TARGET_BLOCK_BYTES // row_bytes, pack))
    lead_count = math.prod(lead) if lead else 1
    if lead_count < _MIN_PROGRAMS and H >= _MIN_PROGRAMS * pack:
        hb = min(hb, max(pack, _round_down(H // _MIN_PROGRAMS, pack)))
    if H <= pack or hb >= H:
        hb = H  # full second-to-last dim is always a legal block extent

    block_bytes = hb * row_bytes
    n_steps = lead_count * pl.cdiv(H, hb)
    # Too fine-grained to amortize the per-step grid overhead: not worth Pallas.
    if block_bytes < 64 * 1024 and n_steps > 64:
        return None
    if block_bytes > _MAX_BLOCK_BYTES:
        return None

    block_shape = (1,) * len(lead) + (hb, W)
    grid = tuple(lead) + (pl.cdiv(H, hb),)

    def index_map(*idxs):
        return idxs[:-1] + (idxs[-1], 0)

    spec = pl.BlockSpec(block_shape, index_map)
    return pl.pallas_call(
        kernel,
        out_shape=jax.ShapeDtypeStruct(shape, x.dtype),
        grid=grid,
        in_specs=[spec],
        out_specs=spec,
        compiler_params=_compiler_params(len(grid)),
        cost_estimate=_cost(math.prod(shape), itemsize),
    )(x)


def temperature_tanh(x: jax.Array, temperature: float = 1.0) -> jax.Array:
    """tanh(x / temperature). `temperature` must be a static Python number."""
    temperature = float(temperature)  # raises clearly if a traced value is passed
    assert temperature != 0.0, "temperature must be nonzero."
    inv_t = 1.0 / temperature

    # Match torch semantics: non-float inputs promote to float via x / T.
    if not jnp.issubdtype(x.dtype, jnp.floating):
        x = x.astype(jnp.float32)
    elif jnp.dtype(x.dtype).itemsize > 4:
        x = x.astype(jnp.float32)  # TPU has no f64 vector path

    n = x.size
    # Small tensors (and 0/1-D inputs): launch + wrapper overhead dominates; a
    # fused XLA elementwise op is strictly faster and can fuse with neighbors.
    if n < _MIN_PALLAS_ELEMENTS or x.ndim < 2:
        return jnp.tanh(x * inv_t)

    dtype = x.dtype
    itemsize = jnp.dtype(dtype).itemsize
    pack = 8 * max(1, 4 // itemsize)  # sublanes per packed vreg tile: 8/16/32
    kernel = functools.partial(_temperature_tanh_kernel, inv_temperature=inv_t)

    shape = x.shape
    lanes = shape[-1]
    rows = n // lanes
    # Lane-dense slab: collapse *leading* dims only. This keeps the tiled last
    # two dims intact, so the reshape is layout-preserving (no relayout copy)
    # when the sublane dim is pack-aligned or untouched.
    collapse_is_free = (x.ndim == 2) or (shape[-2] % pack == 0) or (rows == shape[-2])
    if lanes % 128 == 0 and collapse_is_free:
        out = _slab_call(x.reshape(rows, lanes), kernel, pack, itemsize)
        if out is not None:
            return out.reshape(shape)

    # General path: no reshape at all.
    out = _nd_call(x, kernel, pack, itemsize)
    if out is not None:
        return out

    # Awkward shapes (tiny trailing dims with huge leading count, enormous
    # rows): plain XLA elementwise already runs at the HBM roofline.
    return jnp.tanh(x * inv_t)


class TemperatureTanh:
    """Drop-in mirror of the PyTorch module's forward pass."""

    def __init__(self, temperature: float = 1.0) -> None:
        assert temperature != 0.0, "temperature must be nonzero."
        self._T = float(temperature)

    def __call__(self, x: jax.Array) -> jax.Array:
        return temperature_tanh(x, self._T)


if __name__ == "__main__":
    keys = jax.random.split(jax.random.PRNGKey(0), 5)

    def ref(x, t):
        xf = x if jnp.issubdtype(x.dtype, jnp.floating) else x.astype(jnp.float32)
        return jnp.tanh(xf / t)

    # 1) Typical small activation (batch=2, C=4, H=W=16): small-tensor fast path.
    x0 = jax.random.normal(keys[0], (2, 4, 16, 16), dtype=jnp.float32)
    y0 = jax.block_until_ready(TemperatureTanh(2.0)(x0))
    assert y0.shape == x0.shape and y0.dtype == x0.dtype
    assert jnp.allclose(y0, ref(x0, 2.0), atol=1e-6, rtol=1e-6)

    # 2) Lane-dense Pallas slab path (128-wide last dim, 4 grid programs).
    x1 = jax.random.normal(keys[1], (2, 4, 128, 128), dtype=jnp.float32)
    y1 = jax.block_until_ready(temperature_tanh(x1, temperature=0.5))
    assert jnp.allclose(y1, ref(x1, 0.5), atol=1e-6, rtol=1e-6)

    # 3) bf16 slab path (pack=16 sublanes).
    x2 = jax.random.normal(keys[2], (2, 8, 128, 128), dtype=jnp.bfloat16)
    y2 = jax.block_until_ready(temperature_tanh(x2, temperature=0.5))
    assert y2.dtype == jnp.bfloat16
    assert jnp.allclose(
        y2.astype(jnp.float32),
        jnp.tanh(x2.astype(jnp.float32) / 0.5),
        atol=2e-2, rtol=2e-2,
    )

    # 4) Non-128-aligned trailing dim: no-reshape N-D Pallas path.
    x3 = jax.random.normal(keys[3], (4, 136, 200), dtype=jnp.float32)
    y3 = jax.block_until_ready(temperature_tanh(x3, temperature=1.5))
    assert jnp.allclose(y3, ref(x3, 1.5), atol=1e-6, rtol=1e-6)

    # 5) Integer input promotes to float32 (matches torch's x / T semantics).
    x4 = jnp.arange(60, dtype=jnp.int32).reshape(3, 4, 5)
    y4 = jax.block_until_ready(temperature_tanh(x4, temperature=3.0))
    assert y4.dtype == jnp.float32
    assert jnp.allclose(y4, jnp.tanh(x4.astype(jnp.float32) / 3.0), atol=1e-6)

    print("KERNEL_OK")
</pallas_src>

<mosaic_0001>
module attributes {stable_mosaic.version = 11 : i64} {
  func.func @_temperature_tanh_kernel(%arg0: i32, %arg1: memref<256x128xf32, #tpu.memory_space<vmem>>, %arg2: memref<256x128xf32, #tpu.memory_space<vmem>>) attributes {dimension_semantics = [#tpu.dimension_semantics<parallel>], iteration_bounds = array<i64: 4>, scalar_prefetch = 0 : i64, scratch_operands = 0 : i64, tpu.core_type = #tpu.core_type<tc>, window_params = [{transform_indices = @transform_0, window_bounds = array<i64: 256, 128>}, {transform_indices = @transform_1, window_bounds = array<i64: 256, 128>}]} {
    %c0 = arith.constant 0 : index
    %c0_0 = arith.constant 0 : index
    %0 = vector.load %arg1[%c0, %c0_0] : memref<256x128xf32, #tpu.memory_space<vmem>>, vector<256x128xf32>
    %cst = arith.constant 2.000000e+00 : f32
    %1 = vector.broadcast %cst : f32 to vector<256x128xf32>
    %2 = arith.mulf %0, %1 : vector<256x128xf32>
    %3 = math.tanh %2 : vector<256x128xf32>
    %c0_1 = arith.constant 0 : index
    %c0_2 = arith.constant 0 : index
    %4 = vector.load %arg2[%c0_1, %c0_2] : memref<256x128xf32, #tpu.memory_space<vmem>>, vector<256x128xf32>
    tpu.vector_store %arg2[%c0_1, %c0_2], %3 {strides = array<i32>} : memref<256x128xf32, #tpu.memory_space<vmem>>, vector<256x128xf32>,
    return
  }
  func.func @transform_0(%arg0: i32) -> (i32, i32) {
    %c0_i32 = arith.constant 0 : i32
    %c0_i32_0 = arith.constant 0 : i32
    return %arg0, %c0_i32 : i32, i32
  }
  func.func @transform_1(%arg0: i32) -> (i32, i32) {
    %c0_i32 = arith.constant 0 : i32
    %c0_i32_0 = arith.constant 0 : i32
    return %arg0, %c0_i32 : i32, i32
  }
}

</mosaic_0001>

<llo_original>
// kernel: tpu_custom_call.1
$region0: #{tpu_custom_call.1}
  #allocation0 [shape = 'u32[]', space=smem, size = 0x4, offset = 0x4, fixed_abs, tag = 'smem constant byte address 0x4 - core index']
  #allocation1 [shape = 'u32[72,128]{1,0:T(1,128)}', space=vmem, size = 0x9000, scoped, tag = 'internal scratch']
  %s0 = inlined_call_operand.hbm [shape: f32[1024,128], index: 0, kind: input, shape index: {}]
  %s1 = inlined_call_operand.hbm [shape: f32[1024,128], index: 1, kind: output, shape index: {}]
  %s2 = sld [smem:[#allocation0]]
  $region41: #{tpu_custom_call.1} parent=0
    _
  %s4 = ssub.s32 1, %s2
  %s5 = scalar_select 0, %s4, %s2
  $region1: #{tpu_custom_call.1} parent=0
    #allocation2 [shape = 'u8[262144]{0}', space=vmem, size = 0x40000, scoped, tag = 'input window, operand 0']
    #allocation3 [shape = 's32[2]{0}', space=sflag, size = 0x8, scoped, tag = 'scoped memory for tpu_custom_call.1']
    #allocation4 [shape = 's32[2]{0}', space=sflag, size = 0x8, scoped, tag = 'scoped memory for tpu_custom_call.1']
    #allocation5 [shape = 'u8[262144]{0}', space=vmem, size = 0x40000, scoped, tag = 'output window, operand 0']
    %6 = vsyncpa [#allocation3], 0
    %s7 = scalar_lea.sflag [#allocation3], 1
    %8 = vsyncpa %s7, 0
    %9 = vsyncpa [#allocation4], 0
    %s10 = scalar_lea.sflag [#allocation4], 1
    %11 = vsyncpa %s10, 0
    loop: start=0, step=1, limit=6
    $region2: #{tpu_custom_call.1} parent=1 // loop_pre_header
      _
    $region3: #{tpu_custom_call.1} parent=1 // loop_header
      %s13 = sphi 0, %s17
      %p14 = scmp.ge.s32.totalorder %s13, 6
      %s23 = sphi 0, %s25
      %s26 = sphi 0, %s23
      %s27 = sphi 0, %s26
      %s43 = sphi 0, %s27
      %s49 = sphi 0, %s51
      %s52 = sphi 0, %s49
      %s53 = sphi 0, %s52
      %s69 = sphi 0, %s53
    $region4: #{tpu_custom_call.1} parent=1 // loop_header_branch
      %16 = sbr.rel (%p14) target = $region8
    $region5: #{tpu_custom_call.1} parent=1 // loop_body
      %s18 = ssub.s32 %s13, 1
      %s19 = ssub.s32 %s13, 2
      %s20 = sadd.s32 %s13, 1
      %s21 = ssub.s32 %s13, %s20
      %p22 = scmp.eq.s32.totalorder %s21, 0
      %s24 = sadd.s32 %s23, 1
      %s25 = scalar_select %p22, %s23, %s24
      %p28 = pneg %p22
      %p29 = scmp.eq.s32.totalorder %s13, 3
      %p30 = por %p28, %p29
      %p31 = scmp.ne.s32.totalorder %s23, %s26
      %p32 = scmp.eq.s32.totalorder %s13, 0
      %p33 = por %p31, %p32
      %p34 = scmp.ne.s32.totalorder %s23, %s26
      %p35 = scmp.eq.s32.totalorder %s18, 3
      %p36 = por %p34, %p35
      %p37 = scmp.ne.s32.totalorder %s26, %s27
      %p38 = scmp.eq.s32.totalorder %s18, 0
      %p39 = por %p37, %p38
      %p40 = scmp.ne.s32.totalorder %s26, %s27
      %p41 = scmp.eq.s32.totalorder %s19, 3
      %p42 = por %p40, %p41
      %p44 = scmp.ne.s32.totalorder %s27, %s43
      %p45 = scmp.eq.s32.totalorder %s19, 0
      %p46 = por %p44, %p45
      %s47 = ssub.s32 %s13, %s20
      %p48 = scmp.eq.s32.totalorder %s47, 0
      %s50 = sadd.s32 %s49, 1
      %s51 = scalar_select %p48, %s49, %s50
      %p54 = pneg %p48
      %p55 = scmp.eq.s32.totalorder %s13, 3
      %p56 = por %p54, %p55
      %p57 = scmp.ne.s32.totalorder %s49, %s52
      %p58 = scmp.eq.s32.totalorder %s13, 0
      %p59 = por %p57, %p58
      %p60 = scmp.ne.s32.totalorder %s49, %s52
      %p61 = scmp.eq.s32.totalorder %s18, 3
      %p62 = por %p60, %p61
      %p63 = scmp.ne.s32.totalorder %s52, %s53
      %p64 = scmp.eq.s32.totalorder %s18, 0
      %p65 = por %p63, %p64
      %p66 = scmp.ne.s32.totalorder %s52, %s53
      %p67 = scmp.eq.s32.totalorder %s19, 3
      %p68 = por %p66, %p67
      %p70 = scmp.ne.s32.totalorder %s53, %s69
      %p71 = scmp.eq.s32.totalorder %s19, 0
      %p72 = por %p70, %p71
      %p73 = scmp.le.s32.totalorder 1, %s13
      %p74 = scmp.lt.s32.totalorder %s13, 5
      %p75 = pnand %p73, %p74
      %p76 = pneg %p75
      // Predicated region
      $region9: #{tpu_custom_call.1} parent=5 // pred_check
        _
      $region10: #{tpu_custom_call.1} parent=5 // pred_check_branch
        %78 = sbr.rel (%p75) target = $region12
      $region11: #{tpu_custom_call.1} parent=5 // pred_region
        %s79 = ssub.s32 %s13, 1
      $region12: #{tpu_custom_call.1} parent=5 // pred_fallthru
        _
      %p80 = scmp.lt.s32.totalorder %s13, 4
      // Predicated region
      $region13: #{tpu_custom_call.1} parent=5 // pred_check
        %p81 = pneg %p80
      $region14: #{tpu_custom_call.1} parent=5 // pred_check_branch
        %83 = sbr.rel (%p81) target = $region16
      $region15: #{tpu_custom_call.1} parent=5 // pred_region
        // Predicated region
        $region17: #{tpu_custom_call.1} parent=15 // pred_check
          %p84 = pneg %p33
        $region18: #{tpu_custom_call.1} parent=15 // pred_check_branch
          %86 = sbr.rel (%p84) target = $region20
        $region19: #{tpu_custom_call.1} parent=15 // pred_region
          %s87 = sand.u32 %s23, 1
          %s88 = scalar_lea.sflag [#allocation3], %s87
          %s89 = sand.u32 %s23, 1
          %s90 = smul.addr %s89, 256
          %s91 = scalar_lea.vmem [#allocation2], %s90
          %s92 = smul.u32 32, %s13
          %94 = vsyncadd %s88, 0
          %s95 = smul.addr %s92, 8
          %s96 = scalar_lea.hbm %s0, %s95
          %s97 = sshll.u32 %s96, 4
          %s98 = int_to_ptr.hbm [resolvable:$true] %s97
          %s99 = sshll.u32 %s91, 4
          %s100 = int_to_ptr.vmem [resolvable:$true] %s99
          %105 = dma.hbm_to_vmem [thread:$0]  %s98, 4096, %s100, %s88, 128, 128, 8
        $region20: #{tpu_custom_call.1} parent=15 // pred_fallthru
          _
      $region16: #{tpu_custom_call.1} parent=5 // pred_fallthru
        _
      %p106 = scmp.le.s32.totalorder 1, %s13
      %p107 = scmp.lt.s32.totalorder %s13, 5
      %p108 = pnand %p106, %p107
      %p109 = pneg %p108
      // Predicated region
      $region21: #{tpu_custom_call.1} parent=5 // pred_check
        _
      $region22: #{tpu_custom_call.1} parent=5 // pred_check_branch
        %111 = sbr.rel (%p108) target = $region24
      $region23: #{tpu_custom_call.1} parent=5 // pred_region
        %s112 = ssub.s32 %s13, 1
        %s113 = sand.u32 %s26, 1
        %s114 = scalar_lea.sflag [#allocation3], %s113
        %s115 = sand.u32 %s26, 1
        %s116 = smul.addr %s115, 256
        %s117 = scalar_lea.vmem [#allocation2], %s116
        // Predicated region
        $region25: #{tpu_custom_call.1} parent=23 // pred_check
          %p118 = pneg %p39
        $region26: #{tpu_custom_call.1} parent=23 // pred_check_branch
          %120 = sbr.rel (%p118) target = $region28
        $region27: #{tpu_custom_call.1} parent=23 // pred_region
          %122 = dma.done %s114, 4096
        $region28: #{tpu_custom_call.1} parent=23 // pred_fallthru
          _
        %s123 = sand.u32 %s26, 1
        %s124 = scalar_lea.sflag [#allocation3], %s123
        %s125 = sand.u32 %s26, 1
        %s126 = smul.addr %s125, 256
        %s127 = scalar_lea.vmem [#allocation2], %s126
        %p128 = pneg %p39
        %p129 = pneg %p36
        %p130 = pneg %p65
        %p131 = pneg %p62
        %s132 = sand.u32 %s52, 1
        %s133 = scalar_lea.sflag [#allocation4], %s132
        %s134 = sand.u32 %s52, 1
        %s135 = smul.addr %s134, 256
        %s136 = scalar_lea.vmem [#allocation5], %s135
        %s137 = smul.u32 32, %s18
        %s138 = smul.u32 32, %s18
        %v139 = vld [vmem:[%s117] sm:$0xff]
        %v140 = vld [vmem:[%s117 + $0x8] sm:$0xff]
        %v141 = vld [vmem:[%s117 + $0x10] sm:$0xff]
        %v142 = vld [vmem:[%s117 + $0x18] sm:$0xff]
        %v143 = vld [vmem:[%s117 + $0x20] sm:$0xff]
        %v144 = vld [vmem:[%s117 + $0x28] sm:$0xff]
        %v145 = vld [vmem:[%s117 + $0x30] sm:$0xff]
        %v146 = vld [vmem:[%s117 + $0x38] sm:$0xff]
        %v147 = vld [vmem:[%s117 + $0x40] sm:$0xff]
        %v148 = vld [vmem:[%s117 + $0x48] sm:$0xff]
        %v149 = vld [vmem:[%s117 + $0x50] sm:$0xff]
        %v150 = vld [vmem:[%s117 + $0x58] sm:$0xff]
        %v151 = vld [vmem:[%s117 + $0x60] sm:$0xff]
        %v152 = vld [vmem:[%s117 + $0x68] sm:$0xff]
        %v153 = vld [vmem:[%s117 + $0x70] sm:$0xff]
        %v154 = vld [vmem:[%s117 + $0x78] sm:$0xff]
        %v155 = vld [vmem:[%s117 + $0x80] sm:$0xff]
        %v156 = vld [vmem:[%s117 + $0x88] sm:$0xff]
        %v157 = vld [vmem:[%s117 + $0x90] sm:$0xff]
        %v158 = vld [vmem:[%s117 + $0x98] sm:$0xff]
        %v159 = vld [vmem:[%s117 + $0xa0] sm:$0xff]
        %v160 = vld [vmem:[%s117 + $0xa8] sm:$0xff]
        %v161 = vld [vmem:[%s117 + $0xb0] sm:$0xff]
        %v162 = vld [vmem:[%s117 + $0xb8] sm:$0xff]
        %v163 = vld [vmem:[%s117 + $0xc0] sm:$0xff]
        %v164 = vld [vmem:[%s117 + $0xc8] sm:$0xff]
        %v165 = vld [vmem:[%s117 + $0xd0] sm:$0xff]
        %v166 = vld [vmem:[%s117 + $0xd8] sm:$0xff]
        %v167 = vld [vmem:[%s117 + $0xe0] sm:$0xff]
        %v168 = vld [vmem:[%s117 + $0xe8] sm:$0xff]
        %v169 = vld [vmem:[%s117 + $0xf0] sm:$0xff]
        %v170 = vld [vmem:[%s117 + $0xf8] sm:$0xff]
        %v171 = vmul.f32 %v139, 2.0
        %v172 = vmul.f32 %v140, 2.0
        %v173 = vmul.f32 %v141, 2.0
        %v174 = vmul.f32 %v142, 2.0
        %v175 = vmul.f32 %v143, 2.0
        %v176 = vmul.f32 %v144, 2.0
        %v177 = vmul.f32 %v145, 2.0
        %v178 = vmul.f32 %v146, 2.0
        %v179 = vmul.f32 %v147, 2.0
        %v180 = vmul.f32 %v148, 2.0
        %v181 = vmul.f32 %v149, 2.0
        %v182 = vmul.f32 %v150, 2.0
        %v183 = vmul.f32 %v151, 2.0
        %v184 = vmul.f32 %v152, 2.0
        %v185 = vmul.f32 %v153, 2.0
        %v186 = vmul.f32 %v154, 2.0
        %v187 = vmul.f32 %v155, 2.0
        %v188 = vmul.f32 %v156, 2.0
        %v189 = vmul.f32 %v157, 2.0
        %v190 = vmul.f32 %v158, 2.0
        %v191 = vmul.f32 %v159, 2.0
        %v192 = vmul.f32 %v160, 2.0
        %v193 = vmul.f32 %v161, 2.0
        %v194 = vmul.f32 %v162, 2.0
        %v195 = vmul.f32 %v163, 2.0
        %v196 = vmul.f32 %v164, 2.0
        %v197 = vmul.f32 %v165, 2.0
        %v198 = vmul.f32 %v166, 2.0
        %v199 = vmul.f32 %v167, 2.0
        %v200 = vmul.f32 %v168, 2.0
        %v201 = vmul.f32 %v169, 2.0
        %v202 = vmul.f32 %v170, 2.0
        %v203 = vtanh.pop %v171
        %v204 = vtanh.pop %v172
        %v205 = vtanh.pop %v173
        %v206 = vtanh.pop %v174
        %v207 = vtanh.pop %v175
        %v208 = vtanh.pop %v176
        %v209 = vtanh.pop %v177
        %v210 = vtanh.pop %v178
        %v211 = vtanh.pop %v179
        %v212 = vtanh.pop %v180
        %v213 = vtanh.pop %v181
        %v214 = vtanh.pop %v182
        %v215 = vtanh.pop %v183
        %v216 = vtanh.pop %v184
        %v217 = vtanh.pop %v185
        %v218 = vtanh.pop %v186
        %v219 = vtanh.pop %v187
        %v220 = vtanh.pop %v188
        %v221 = vtanh.pop %v189
        %v222 = vtanh.pop %v190
        %v223 = vtanh.pop %v191
        %v224 = vtanh.pop %v192
        %v225 = vtanh.pop %v193
        %v226 = vtanh.pop %v194
        %v227 = vtanh.pop %v195
        %v228 = vtanh.pop %v196
        %v229 = vtanh.pop %v197
        %v230 = vtanh.pop %v198
        %v231 = vtanh.pop %v199
        %v232 = vtanh.pop %v200
        %v233 = vtanh.pop %v201
        %v234 = vtanh.pop %v202
        %235 = vst [vmem:[%s136] sm:$0xff] %v203
        %236 = vst [vmem:[%s136 + $0x8] sm:$0xff] %v204
        %237 = vst [vmem:[%s136 + $0x10] sm:$0xff] %v205
        %238 = vst [vmem:[%s136 + $0x18] sm:$0xff] %v206
        %239 = vst [vmem:[%s136 + $0x20] sm:$0xff] %v207
        %240 = vst [vmem:[%s136 + $0x28] sm:$0xff] %v208
        %241 = vst [vmem:[%s136 + $0x30] sm:$0xff] %v209
        %242 = vst [vmem:[%s136 + $0x38] sm:$0xff] %v210
        %243 = vst [vmem:[%s136 + $0x40] sm:$0xff] %v211
        %244 = vst [vmem:[%s136 + $0x48] sm:$0xff] %v212
        %245 = vst [vmem:[%s136 + $0x50] sm:$0xff] %v213
        %246 = vst [vmem:[%s136 + $0x58] sm:$0xff] %v214
        %247 = vst [vmem:[%s136 + $0x60] sm:$0xff] %v215
        %248 = vst [vmem:[%s136 + $0x68] sm:$0xff] %v216
        %249 = vst [vmem:[%s136 + $0x70] sm:$0xff] %v217
        %250 = vst [vmem:[%s136 + $0x78] sm:$0xff] %v218
        %251 = vst [vmem:[%s136 + $0x80] sm:$0xff] %v219
        %252 = vst [vmem:[%s136 + $0x88] sm:$0xff] %v220
        %253 = vst [vmem:[%s136 + $0x90] sm:$0xff] %v221
        %254 = vst [vmem:[%s136 + $0x98] sm:$0xff] %v222
        %255 = vst [vmem:[%s136 + $0xa0] sm:$0xff] %v223
        %256 = vst [vmem:[%s136 + $0xa8] sm:$0xff] %v224
        %257 = vst [vmem:[%s136 + $0xb0] sm:$0xff] %v225
        %258 = vst [vmem:[%s136 + $0xb8] sm:$0xff] %v226
        %259 = vst [vmem:[%s136 + $0xc0] sm:$0xff] %v227
        %260 = vst [vmem:[%s136 + $0xc8] sm:$0xff] %v228
        %261 = vst [vmem:[%s136 + $0xd0] sm:$0xff] %v229
        %262 = vst [vmem:[%s136 + $0xd8] sm:$0xff] %v230
        %263 = vst [vmem:[%s136 + $0xe0] sm:$0xff] %v231
        %264 = vst [vmem:[%s136 + $0xe8] sm:$0xff] %v232
        %265 = vst [vmem:[%s136 + $0xf0] sm:$0xff] %v233
        %266 = vst [vmem:[%s136 + $0xf8] sm:$0xff] %v234
        %s267 = sand.u32 %s52, 1
        %s268 = scalar_lea.sflag [#allocation4], %s267
        %s269 = sand.u32 %s52, 1
        %s270 = smul.addr %s269, 256
        %s271 = scalar_lea.vmem [#allocation5], %s270
        // Predicated region
        $region29: #{tpu_custom_call.1} parent=23 // pred_check
          %p272 = pneg %p62
        $region30: #{tpu_custom_call.1} parent=23 // pred_check_branch
          %274 = sbr.rel (%p272) target = $region32
        $region31: #{tpu_custom_call.1} parent=23 // pred_region
          %s275 = smul.u32 32, %s18
          %277 = vsyncadd %s268, 0
          %s278 = smul.addr %s275, 8
          %s279 = scalar_lea.hbm %s1, %s278
          %s280 = sshll.u32 %s271, 4
          %s281 = int_to_ptr.vmem [resolvable:$true] %s280
          %s282 = sshll.u32 %s279, 4
          %s283 = int_to_ptr.hbm [resolvable:$true] %s282
          %288 = dma.vmem_to_hbm [thread:$0]  %s281, 4096, %s283, %s268, 128, 128, 8
        $region32: #{tpu_custom_call.1} parent=23 // pred_fallthru
          _
      $region24: #{tpu_custom_call.1} parent=5 // pred_fallthru
        _
      %p289 = scmp.le.s32.totalorder 2, %s13
      // Predicated region
      $region33: #{tpu_custom_call.1} parent=5 // pred_check
        %p290 = pneg %p289
      $region34: #{tpu_custom_call.1} parent=5 // pred_check_branch
        %292 = sbr.rel (%p290) target = $region36
      $region35: #{tpu_custom_call.1} parent=5 // pred_region
        %s293 = ssub.s32 %s13, 2
        // Predicated region
        $region37: #{tpu_custom_call.1} parent=35 // pred_check
          %p294 = pneg %p68
        $region38: #{tpu_custom_call.1} parent=35 // pred_check_branch
          %296 = sbr.rel (%p294) target = $region40
        $region39: #{tpu_custom_call.1} parent=35 // pred_region
          %s297 = sand.u32 %s53, 1
          %s298 = scalar_lea.sflag [#allocation4], %s297
          %s299 = sand.u32 %s53, 1
          %s300 = smul.addr %s299, 256
          %s301 = scalar_lea.vmem [#allocation5], %s300
          %303 = dma.done %s298, 4096
        $region40: #{tpu_custom_call.1} parent=35 // pred_fallthru
          _
      $region36: #{tpu_custom_call.1} parent=5 // pred_fallthru
        _
    $region6: #{tpu_custom_call.1} parent=1 // loop_footer
      %s17 = sadd.s32 1, %s13
    $region7: #{tpu_custom_call.1} parent=1 // loop_footer_branch
      %12 = sbr.rel target = $region3
    $region8: #{tpu_custom_call.1} parent=1 // loop_exit
      _
    %304 = vsyncpa [#allocation3], 1
    %s305 = scalar_lea.sflag [#allocation3], 1
    %306 = vsyncpa %s305, 1
    %307 = vsyncpa [#allocation4], 1
    %s308 = scalar_lea.sflag [#allocation4], 1
    %309 = vsyncpa %s308, 1

</llo_original>
